<compile_context>
chip_gen: v6e
topology: v6e:2x2x1
jax: 0.10.0
libtpu: 0.0.40
codegen_flags: <defaults>
</compile_context>

<pallas_src>
import math
from typing import NamedTuple, Optional

import jax
import jax.numpy as jnp
from jax.experimental import pallas as pl
from jax.experimental.pallas import tpu as pltpu

_MIB = 1024 * 1024


def _round_up(a: int, b: int) -> int:
    return (a + b - 1) // b * b


def _device_kind() -> str:
    try:
        return jax.devices()[0].device_kind.lower()
    except Exception:
        return ""


def _vmem_capacity_bytes(kind: str) -> int:
    try:
        info = pltpu.get_tpu_info()
        cap = int(getattr(info, "vmem_capacity_bytes", 0) or 0)
        if cap > 0:
            return cap
    except Exception:
        pass
    if "v7" in kind:
        return 64 * _MIB
    if "v5" in kind or "v6" in kind:
        return 128 * _MIB
    return 64 * _MIB  # conservative default for unknown generations


# ----------------------------------------------------------------------------
# Kernels
# ----------------------------------------------------------------------------
def _linear_kernel_single_k(x_ref, w_ref, b_ref, o_ref):
    """K fits in one tile: no accumulator at all."""
    acc = jnp.dot(x_ref[...], w_ref[...], preferred_element_type=jnp.float32)
    o_ref[...] = (acc + b_ref[...].astype(jnp.float32)).astype(o_ref.dtype)


def _linear_kernel_f32_out(x_ref, w_ref, b_ref, o_ref):
    """f32 output: accumulate directly into the resident o_ref block."""
    k = pl.program_id(2)

    @pl.when(k == 0)
    def _():
        o_ref[...] = jnp.broadcast_to(
            b_ref[...].astype(jnp.float32), o_ref.shape)

    o_ref[...] += jnp.dot(x_ref[...], w_ref[...],
                          preferred_element_type=jnp.float32)


def _linear_kernel_acc(x_ref, w_ref, b_ref, o_ref, acc_ref):
    """Non-f32 output: f32 VMEM accumulator, single cast on the last K step."""
    k = pl.program_id(2)

    @pl.when(k == 0)
    def _():
        acc_ref[...] = jnp.broadcast_to(
            b_ref[...].astype(jnp.float32), acc_ref.shape)

    acc_ref[...] += jnp.dot(x_ref[...], w_ref[...],
                            preferred_element_type=jnp.float32)

    @pl.when(k == pl.num_programs(2) - 1)
    def _():
        o_ref[...] = acc_ref[...].astype(o_ref.dtype)


# ----------------------------------------------------------------------------
# Parameter preparation (one-time, off the hot path)
# ----------------------------------------------------------------------------
class LinearDecoderParams(NamedTuple):
    w_t: jax.Array    # (Kp, Np) pre-transposed, zero-padded weight
    bias: jax.Array   # (1, Np) zero-padded bias (f32)
    in_dim: int
    out_dim: int


def prepare_linear_params(weight, bias, *, weight_dtype=None) -> LinearDecoderParams:
    """Convert PyTorch nn.Linear params to kernel layout ONCE.

    weight: (out_dim, in_dim), bias: (out_dim,).  Transpose and zero-padding
    are done here so the forward pass never rewrites the weight in HBM.
    """
    w = jnp.asarray(weight)
    b = jnp.asarray(bias)
    out_dim, in_dim = w.shape
    assert b.shape == (out_dim,), "bias shape mismatch"
    if weight_dtype is not None:
        w = w.astype(weight_dtype)

    Kp = _round_up(in_dim, 128)
    if out_dim >= 512:
        n_align = 512      # allows lane-dense tn=512 tiles
    elif out_dim >= 256:
        n_align = 256
    else:
        n_align = 128
    Np = _round_up(out_dim, n_align)

    w_t = jnp.pad(w.T, ((0, Kp - in_dim), (0, Np - out_dim)))
    b2 = jnp.pad(b.reshape(1, out_dim).astype(jnp.float32),
                 ((0, 0), (0, Np - out_dim)))
    return LinearDecoderParams(w_t=w_t, bias=b2, in_dim=in_dim, out_dim=out_dim)


# ----------------------------------------------------------------------------
# Tile planning (generation-aware)
# ----------------------------------------------------------------------------
def _largest_aligned_divisor(dim: int, cap: int) -> int:
    """Largest multiple of 128 dividing `dim` (itself a 128-multiple), <= cap."""
    q = dim // 128
    best = 128
    for d in range(1, q + 1):
        if q % d == 0 and 128 * d <= cap:
            best = 128 * d
    return best


def _plan(M, Kp, Np, in_itemsize, out_itemsize, out_is_f32, kind,
          tk_cap: Optional[int]):
    cap_bytes = _vmem_capacity_bytes(kind)
    budget = int(0.55 * cap_bytes)

    # tm: single M tile for modest M (no weight re-streaming, no padded-row
    # FLOPs); round to the dtype's sublane pack size.
    pack = 8 if in_itemsize >= 4 else (16 if in_itemsize == 2 else 32)
    if M <= 1024:
        tm = _round_up(M, pack)
    else:
        tm = 512
    Mp = _round_up(M, tm)
    m_blocks = Mp // tm

    # tn: lane-dense, up to 512; keep >=2 parallel N blocks on v7x (2 TCs)
    # when the M axis collapses to a single block.
    tn_cap = 512
    if "v7" in kind and m_blocks == 1 and Np >= 256:
        tn_cap = min(tn_cap, Np // 2)
    tn = _largest_aligned_divisor(Np, max(tn_cap, 128))

    needs_acc = not out_is_f32   # conservative (ignores single-K special case)

    def vmem_needed(tm_, tk_, tn_, wbuf=2):
        n = (2 * tm_ * tk_ * in_itemsize        # x pipeline buffers
             + wbuf * tk_ * tn_ * in_itemsize   # weight pipeline buffers
             + 2 * tm_ * tn_ * out_itemsize     # output pipeline buffers
             + 2 * tn_ * 4)                     # bias
        if needs_acc:
            n += tm_ * tn_ * 4                  # f32 accumulator scratch
        return n

    # tk: largest K slab that fits the budget (fewer K steps -> fewer
    # accumulator VMEM round trips, MXU stays fed).
    max_tk = 2048 if tk_cap is None else min(2048, tk_cap)
    tk = 128
    q = Kp // 128
    for d in range(q, 0, -1):
        if q % d:
            continue
        cand = 128 * d
        if cand > max_tk:
            continue
        if vmem_needed(tm, cand, tn) <= budget:
            tk = cand
            break
    # Last-resort shrink (tiny shapes always fit; kept for robustness).
    while vmem_needed(tm, tk, tn) > budget and tn > 128:
        tn = _largest_aligned_divisor(Np, tn - 128)
    while vmem_needed(tm, tk, tn) > budget and tm > pack:
        tm = max(pack, _round_up(tm // 2, pack))
        Mp = _round_up(M, tm)

    k_blocks = Kp // tk

    # v5e: a third weight buffer hides DMA jitter on the dominant HBM stream.
    is_v5e = ("v5e" in kind) or ("v5 lite" in kind) or ("v5lite" in kind)
    weight_bufs = 2
    if is_v5e and k_blocks >= 3 and vmem_needed(tm, tk, tn, wbuf=3) <= budget:
        weight_bufs = 3

    needed = vmem_needed(tm, tk, tn, wbuf=weight_bufs)
    vmem_limit = int(min(int(0.9 * cap_bytes),
                         max(int(1.35 * needed) + 4 * _MIB, 32 * _MIB)))
    return Mp, tm, tn, tk, weight_bufs, vmem_limit


# ----------------------------------------------------------------------------
# Forward pass
# ----------------------------------------------------------------------------
def linear_decoder(x, params: LinearDecoderParams, *,
                   tk_cap: Optional[int] = None):
    """y = x @ W^T + b.  `params` comes from prepare_linear_params."""
    orig_shape = x.shape
    K = orig_shape[-1]
    assert K == params.in_dim, "input_dim mismatch"
    x2 = x.reshape(-1, K)
    M = x2.shape[0]
    Kp, Np = params.w_t.shape
    N = params.out_dim

    out_dtype = x2.dtype
    out_is_f32 = out_dtype == jnp.float32
    kind = _device_kind()

    Mp, tm, tn, tk, wbufs, vmem_limit = _plan(
        M, Kp, Np, x2.dtype.itemsize, jnp.dtype(out_dtype).itemsize,
        out_is_f32, kind, tk_cap)

    # Only x (the small operand) is padded on the hot path; weight/bias were
    # padded once at init.  Zero-padding is exact for x @ W + b.
    if (Mp, Kp) != (M, K):
        x2 = jnp.pad(x2, ((0, Mp - M), (0, Kp - K)))

    grid = (Mp // tm, Np // tn, Kp // tk)
    k_blocks = grid[2]

    w_idx = lambda i, j, k: (k, j)
    w_spec = pl.BlockSpec((tk, tn), w_idx)
    if wbufs > 2:
        try:
            w_spec = pl.BlockSpec((tk, tn), w_idx,
                                  pipeline_mode=pl.Buffered(wbufs))
        except TypeError:  # fall back gracefully if signature differs
            w_spec = pl.BlockSpec((tk, tn), w_idx)

    in_specs = [
        pl.BlockSpec((tm, tk), lambda i, j, k: (i, k)),   # x row tile
        w_spec,                                           # weight tile
        pl.BlockSpec((1, tn), lambda i, j, k: (0, j)),    # bias tile
    ]
    out_spec = pl.BlockSpec((tm, tn), lambda i, j, k: (i, j))

    if k_blocks == 1:
        kernel = _linear_kernel_single_k
        scratch = []
    elif out_is_f32:
        kernel = _linear_kernel_f32_out
        scratch = []
    else:
        kernel = _linear_kernel_acc
        scratch = [pltpu.VMEM((tm, tn), jnp.float32)]

    cost = pl.CostEstimate(
        flops=2 * M * N * K,
        transcendentals=0,
        bytes_accessed=(M * K * x2.dtype.itemsize
                        + Kp * Np * params.w_t.dtype.itemsize
                        + Np * 4
                        + M * N * jnp.dtype(out_dtype).itemsize),
    )

    out = pl.pallas_call(
        kernel,
        out_shape=jax.ShapeDtypeStruct((Mp, Np), out_dtype),
        grid_spec=pltpu.PrefetchScalarGridSpec(
            num_scalar_prefetch=0,
            grid=grid,
            in_specs=in_specs,
            out_specs=out_spec,
            scratch_shapes=scratch,
        ),
        compiler_params=pltpu.CompilerParams(
            dimension_semantics=("parallel", "parallel", "arbitrary"),
            vmem_limit_bytes=vmem_limit,
        ),
        cost_estimate=cost,
    )(x2, params.w_t, params.bias)

    out = out[:M, :N]
    return out.reshape(orig_shape[:-1] + (N,))


def _xavier_uniform(key, out_dim, in_dim, dtype=jnp.float32):
    # Matches nn.init.xavier_uniform_ for a (out_dim, in_dim) weight.
    limit = math.sqrt(6.0 / (in_dim + out_dim))
    return jax.random.uniform(key, (out_dim, in_dim), dtype=dtype,
                              minval=-limit, maxval=limit)


if __name__ == "__main__":
    key = jax.random.PRNGKey(0)

    # --- Case 1: small ragged shapes (padding path, single K step). --------
    batch, input_dim, output_dim = 8, 32, 48
    kx, kw, key = jax.random.split(key, 3)
    x = jax.random.normal(kx, (batch, input_dim), dtype=jnp.float32)
    weight = _xavier_uniform(kw, output_dim, input_dim)   # PyTorch (out, in)
    bias = jnp.zeros((output_dim,), dtype=jnp.float32)    # zeros_ init
    params = prepare_linear_params(weight, bias)           # one-time transpose+pad

    y = linear_decoder(x, params)
    jax.block_until_ready(y)
    y_ref = x @ weight.T + bias
    assert y.shape == (batch, output_dim)
    assert jnp.allclose(y, y_ref, atol=1e-4, rtol=1e-4), "case 1 mismatch"

    # --- Case 2: multi-K-step f32 path (accumulate directly into o_ref). ---
    batch, input_dim, output_dim = 24, 384, 256
    kx, kw, kb, key = jax.random.split(key, 4)
    x = jax.random.normal(kx, (batch, input_dim), dtype=jnp.float32)
    weight = _xavier_uniform(kw, output_dim, input_dim)
    bias = 0.1 * jax.random.normal(kb, (output_dim,), dtype=jnp.float32)
    params = prepare_linear_params(weight, bias)
    y = linear_decoder(x, params, tk_cap=128)   # force 3 K steps
    jax.block_until_ready(y)
    y_ref = x @ weight.T + bias
    assert jnp.allclose(y, y_ref, atol=2e-4, rtol=2e-4), "case 2 mismatch"

    # --- Case 3: bf16 inputs, f32 accumulator scratch, multi-K-step. -------
    params_bf16 = prepare_linear_params(weight, bias, weight_dtype=jnp.bfloat16)
    y_bf16 = linear_decoder(x.astype(jnp.bfloat16), params_bf16, tk_cap=128)
    jax.block_until_ready(y_bf16)
    assert y_bf16.dtype == jnp.bfloat16
    assert jnp.allclose(y_bf16.astype(jnp.float32), y_ref,
                        atol=5e-2, rtol=5e-2), "case 3 mismatch"

    print("KERNEL_OK")
</pallas_src>

<mosaic_0001>
module attributes {stable_mosaic.version = 11 : i64} {
  func.func @_linear_kernel_single_k(%arg0: i32, %arg1: i32, %arg2: i32, %arg3: memref<8x128xf32, #tpu.memory_space<vmem>>, %arg4: memref<128x128xf32, #tpu.memory_space<vmem>>, %arg5: memref<1x128xf32, #tpu.memory_space<vmem>>, %arg6: memref<8x128xf32, #tpu.memory_space<vmem>>) attributes {dimension_semantics = [#tpu.dimension_semantics<parallel>, #tpu.dimension_semantics<parallel>, #tpu.dimension_semantics<arbitrary>], iteration_bounds = array<i64: 1, 1, 1>, scalar_prefetch = 0 : i64, scratch_operands = 0 : i64, tpu.core_type = #tpu.core_type<tc>, window_params = [{transform_indices = @transform_0, window_bounds = array<i64: 8, 128>}, {transform_indices = @transform_1, window_bounds = array<i64: 128, 128>}, {transform_indices = @transform_2, window_bounds = array<i64: 1, 128>}, {transform_indices = @transform_3, window_bounds = array<i64: 8, 128>}]} {
    %c0 = arith.constant 0 : index
    %c0_0 = arith.constant 0 : index
    %0 = vector.load %arg3[%c0, %c0_0] : memref<8x128xf32, #tpu.memory_space<vmem>>, vector<8x128xf32>
    %c0_1 = arith.constant 0 : index
    %c0_2 = arith.constant 0 : index
    %1 = vector.load %arg4[%c0_1, %c0_2] : memref<128x128xf32, #tpu.memory_space<vmem>>, vector<128x128xf32>
    %cst = arith.constant dense<0.000000e+00> : vector<8x128xf32>
    %2 = tpu.matmul %0, %1, %cst {dimension_numbers = #tpu.dot_dimension_numbers<[1], [0], [0], [1], [0, 0, 1, 1], [], []>} : vector<8x128xf32>, vector<128x128xf32>, vector<8x128xf32> -> vector<8x128xf32>
    %c0_3 = arith.constant 0 : index
    %c0_4 = arith.constant 0 : index
    %3 = vector.load %arg5[%c0_3, %c0_4] : memref<1x128xf32, #tpu.memory_space<vmem>>, vector<1x128xf32>
    %4 = vector.broadcast %3 : vector<1x128xf32> to vector<8x128xf32>
    %5 = arith.addf %2, %4 : vector<8x128xf32>
    %c0_5 = arith.constant 0 : index
    %c0_6 = arith.constant 0 : index
    %6 = vector.load %arg6[%c0_5, %c0_6] : memref<8x128xf32, #tpu.memory_space<vmem>>, vector<8x128xf32>
    tpu.vector_store %arg6[%c0_5, %c0_6], %5 {strides = array<i32>} : memref<8x128xf32, #tpu.memory_space<vmem>>, vector<8x128xf32>,
    return
  }
  func.func @transform_0(%arg0: i32, %arg1: i32, %arg2: i32) -> (i32, i32) {
    %c0_i32 = arith.constant 0 : i32
    return %arg0, %arg2 : i32, i32
  }
  func.func @transform_1(%arg0: i32, %arg1: i32, %arg2: i32) -> (i32, i32) {
    %c0_i32 = arith.constant 0 : i32
    return %arg2, %arg1 : i32, i32
  }
  func.func @transform_2(%arg0: i32, %arg1: i32, %arg2: i32) -> (i32, i32) {
    %c0_i32 = arith.constant 0 : i32
    %c0_i32_0 = arith.constant 0 : i32
    return %c0_i32, %arg1 : i32, i32
  }
  func.func @transform_3(%arg0: i32, %arg1: i32, %arg2: i32) -> (i32, i32) {
    %c0_i32 = arith.constant 0 : i32
    return %arg0, %arg1 : i32, i32
  }
}

</mosaic_0001>

<llo_original>
// kernel: tpu_custom_call.1
$region0: #{tpu_custom_call.1}
  #allocation0 [shape = 'u32[]', space=smem, size = 0x4, offset = 0x4, fixed_abs, tag = 'smem constant byte address 0x4 - core index']
  #allocation1 [shape = 'u32[144,128]{1,0:T(1,128)}', space=vmem, size = 0x12000, scoped, tag = 'internal scratch']
  %s0 = inlined_call_operand.hbm [shape: f32[8,128], index: 0, kind: input, shape index: {}]
  %s1 = inlined_call_operand.hbm [shape: f32[128,128], index: 1, kind: input, shape index: {}]
  %s2 = inlined_call_operand.vmem [shape: f32[1,128], index: 2, kind: input, shape index: {}]
  %s3 = inlined_call_operand.hbm [shape: f32[8,128], index: 3, kind: output, shape index: {}]
  %s4 = sld [smem:[#allocation0]]
  $region30: #{tpu_custom_call.1} parent=0
    _
  %s6 = ssub.s32 1, %s4
  %s7 = scalar_select 0, %s6, %s4
  $region1: #{tpu_custom_call.1} parent=0
    #allocation2 [shape = 'u8[4096]{0}', space=vmem, size = 0x1000, scoped, tag = 'input window, operand 0, single buffered']
    #allocation3 [shape = 's32[1]{0}', space=sflag, size = 0x4, scoped, tag = 'scoped memory for tpu_custom_call.1']
    #allocation4 [shape = 's32[1]{0}', space=sflag, size = 0x4, scoped, tag = 'scoped memory for tpu_custom_call.1']
    #allocation5 [shape = 'u8[65536]{0}', space=vmem, size = 0x10000, scoped, tag = 'input window, operand 1, single buffered']
    #allocation6 [shape = 's32[1]{0}', space=sflag, size = 0x4, scoped, tag = 'scoped memory for tpu_custom_call.1']
    #allocation7 [shape = 'u8[4096]{0}', space=vmem, size = 0x1000, scoped, tag = 'output window, operand 0, single buffered']
    %8 = vsyncpa [#allocation3], 0
    %9 = vsyncpa [#allocation6], 0
    %10 = vsyncpa [#allocation4], 0
    // Predicated region
    $region2: #{tpu_custom_call.1} parent=1 // pred_check
      _
    $region3: #{tpu_custom_call.1} parent=1 // pred_check_branch
      %12 = sbr.rel (0) target = $region5
    $region4: #{tpu_custom_call.1} parent=1 // pred_region
      %s14 = ssub.s32 128, 128
      %15 = vsyncadd [#allocation3], %s14
      %s17 = sshll.u32 [#allocation2], 4
      %s18 = int_to_ptr.vmem [resolvable:$true] %s17
      %20 = dma.hbm_to_vmem [thread:$0]  %s0, 128, %s18, [#allocation3]
    $region5: #{tpu_custom_call.1} parent=1 // pred_fallthru
      _
    // Predicated region
    $region6: #{tpu_custom_call.1} parent=1 // pred_check
      _
    $region7: #{tpu_custom_call.1} parent=1 // pred_check_branch
      %22 = sbr.rel (0) target = $region9
    $region8: #{tpu_custom_call.1} parent=1 // pred_region
      %s24 = ssub.s32 2048, 2048
      %25 = vsyncadd [#allocation6], %s24
      %s26 = sshll.u32 [#allocation5], 4
      %s27 = int_to_ptr.vmem [resolvable:$true] %s26
      %32 = dma.hbm_to_vmem [thread:$0]  %s1, 2048, %s27, [#allocation6], 128, 128, 8
    $region9: #{tpu_custom_call.1} parent=1 // pred_fallthru
      _
    // Predicated region
    $region10: #{tpu_custom_call.1} parent=1 // pred_check
      _
    $region11: #{tpu_custom_call.1} parent=1 // pred_check_branch
      %34 = sbr.rel (0) target = $region13
    $region12: #{tpu_custom_call.1} parent=1 // pred_region
      _
    $region13: #{tpu_custom_call.1} parent=1 // pred_fallthru
      _
    // Predicated region
    $region14: #{tpu_custom_call.1} parent=1 // pred_check
      _
    $region15: #{tpu_custom_call.1} parent=1 // pred_check_branch
      %36 = sbr.rel (0) target = $region17
    $region16: #{tpu_custom_call.1} parent=1 // pred_region
      %37 = dma.done [#allocation3], 128
    $region17: #{tpu_custom_call.1} parent=1 // pred_fallthru
      _
    // Predicated region
    $region18: #{tpu_custom_call.1} parent=1 // pred_check
      _
    $region19: #{tpu_custom_call.1} parent=1 // pred_check_branch
      %39 = sbr.rel (0) target = $region21
    $region20: #{tpu_custom_call.1} parent=1 // pred_region
      %40 = dma.done [#allocation6], 2048
    $region21: #{tpu_custom_call.1} parent=1 // pred_fallthru
      _
    %v41 = vld [vmem:[#allocation2] sm:$0xff]
    %v42 = vld [vmem:[#allocation5] sm:$0xff]
    %v43 = vld [vmem:[#allocation5 + $0x8] sm:$0xff]
    %v44 = vld [vmem:[#allocation5 + $0x10] sm:$0xff]
    %v45 = vld [vmem:[#allocation5 + $0x18] sm:$0xff]
    %v46 = vld [vmem:[#allocation5 + $0x20] sm:$0xff]
    %v47 = vld [vmem:[#allocation5 + $0x28] sm:$0xff]
    %v48 = vld [vmem:[#allocation5 + $0x30] sm:$0xff]
    %v49 = vld [vmem:[#allocation5 + $0x38] sm:$0xff]
    %v50 = vld [vmem:[#allocation5 + $0x40] sm:$0xff]
    %v51 = vld [vmem:[#allocation5 + $0x48] sm:$0xff]
    %v52 = vld [vmem:[#allocation5 + $0x50] sm:$0xff]
    %v53 = vld [vmem:[#allocation5 + $0x58] sm:$0xff]
    %v54 = vld [vmem:[#allocation5 + $0x60] sm:$0xff]
    %v55 = vld [vmem:[#allocation5 + $0x68] sm:$0xff]
    %v56 = vld [vmem:[#allocation5 + $0x70] sm:$0xff]
    %v57 = vld [vmem:[#allocation5 + $0x78] sm:$0xff]
    %v58 = vld [vmem:[%s2] sm:$0x1]
    %v60 = vlaneseq
    %v61 = vshrl.u32 %v60, 7
    %v62 = vsub.s32 0, %v61
    %v63 = vrot.slane %v58, %v62
    %65 = vmatprep.subr.mxu0 0.0
    %66 = vmatpush1.msra.mxu0 %v57
    %67 = vmatprep.subr.mxu0 0.0
    %68 = vmatpush1.msra.mxu0 %v56
    %69 = vmatprep.subr.mxu0 0.0
    %70 = vmatpush1.msra.mxu0 %v55
    %71 = vmatprep.subr.mxu0 0.0
    %72 = vmatpush1.msra.mxu0 %v54
    %73 = vmatprep.subr.mxu0 0.0
    %74 = vmatpush1.msra.mxu0 %v53
    %75 = vmatprep.subr.mxu0 0.0
    %76 = vmatpush1.msra.mxu0 %v52
    %77 = vmatprep.subr.mxu0 0.0
    %78 = vmatpush1.msra.mxu0 %v51
    %79 = vmatprep.subr.mxu0 0.0
    %80 = vmatpush1.msra.mxu0 %v50
    %81 = vmatprep.subr.mxu0 0.0
    %82 = vmatpush1.msra.mxu0 %v49
    %83 = vmatprep.subr.mxu0 0.0
    %84 = vmatpush1.msra.mxu0 %v48
    %85 = vmatprep.subr.mxu0 0.0
    %86 = vmatpush1.msra.mxu0 %v47
    %87 = vmatprep.subr.mxu0 0.0
    %88 = vmatpush1.msra.mxu0 %v46
    %89 = vmatprep.subr.mxu0 0.0
    %90 = vmatpush1.msra.mxu0 %v45
    %91 = vmatprep.subr.mxu0 0.0
    %92 = vmatpush1.msra.mxu0 %v44
    %93 = vmatprep.subr.mxu0 0.0
    %94 = vmatpush1.msra.mxu0 %v43
    %95 = vmatprep.subr.mxu0 0.0
    %96 = vmatpush1.msra.mxu0 %v42
    %97 = vmatprep.subr.mxu0 0.0
    %98 = vmatpush2.msra.mxu0 0.0
    %99 = vmatprep.subr.mxu0 0.0
    %100 = vmatpush2.msra.mxu0 0.0
    %101 = vmatprep.subr.mxu0 0.0
    %102 = vmatpush2.msra.mxu0 0.0
    %103 = vmatprep.subr.mxu0 0.0
    %104 = vmatpush2.msra.mxu0 0.0
    %105 = vmatprep.subr.mxu0 0.0
    %106 = vmatpush2.msra.mxu0 0.0
    %107 = vmatprep.subr.mxu0 0.0
    %108 = vmatpush2.msra.mxu0 0.0
    %109 = vmatprep.subr.mxu0 0.0
    %110 = vmatpush2.msra.mxu0 0.0
    %111 = vmatprep.subr.mxu0 0.0
    %112 = vmatpush2.msra.mxu0 0.0
    %113 = vmatprep.subr.mxu0 0.0
    %114 = vmatpush2.msra.mxu0 0.0
    %115 = vmatprep.subr.mxu0 0.0
    %116 = vmatpush2.msra.mxu0 0.0
    %117 = vmatprep.subr.mxu0 0.0
    %118 = vmatpush2.msra.mxu0 0.0
    %119 = vmatprep.subr.mxu0 0.0
    %120 = vmatpush2.msra.mxu0 0.0
    %121 = vmatprep.subr.mxu0 0.0
    %122 = vmatpush2.msra.mxu0 0.0
    %123 = vmatprep.subr.mxu0 0.0
    %124 = vmatpush2.msra.mxu0 0.0
    %125 = vmatprep.subr.mxu0 0.0
    %126 = vmatpush2.msra.mxu0 0.0
    %127 = vmatprep.subr.mxu0 0.0
    %128 = vmatpush2.msra.mxu0 0.0
    %129 = vmatprep.mubr.f32.mxu0 0.0
    %130 = vmatmul.mubr.f32.gmra.mxu0 %v41
    %v131 = vpop.f32.mrf.mxu0
    %v132 = vadd.f32 %v63, %v131
    %v133 = vpop.f32.mrf.mxu0
    %134 = vdwg.mxu0
    %135 = vst [vmem:[#allocation7] sm:$0xff] %v132
    // Predicated region
    $region22: #{tpu_custom_call.1} parent=1 // pred_check
      _
    $region23: #{tpu_custom_call.1} parent=1 // pred_check_branch
      %137 = sbr.rel (0) target = $region25
    $region24: #{tpu_custom_call.1} parent=1 // pred_region
      %s139 = ssub.s32 128, 128
      %140 = vsyncadd [#allocation4], %s139
      %s142 = sshll.u32 [#allocation7], 4
      %s143 = int_to_ptr.vmem [resolvable:$true] %s142
      %145 = dma.vmem_to_hbm [thread:$0]  %s143, 128, %s3, [#allocation4]
    $region25: #{tpu_custom_call.1} parent=1 // pred_fallthru
      _
    // Predicated region
    $region26: #{tpu_custom_call.1} parent=1 // pred_check
      _
    $region27: #{tpu_custom_call.1} parent=1 // pred_check_branch
      %147 = sbr.rel (0) target = $region29
    $region28: #{tpu_custom_call.1} parent=1 // pred_region
      %148 = dma.done [#allocation4], 128
    $region29: #{tpu_custom_call.1} parent=1 // pred_fallthru
      _
    %149 = vsyncpa [#allocation3], 1
    %150 = vsyncpa [#allocation6], 1
    %151 = vsyncpa [#allocation4], 1

</llo_original>
